<compile_context>
chip_gen: v6e
topology: v6e:2x2x1
jax: 0.10.0
libtpu: 0.0.40
codegen_flags: <defaults>
</compile_context>

<pallas_src>
import jax
import jax.numpy as jnp
from jax import lax
from jax.experimental import pallas as pl
from jax.experimental.pallas import tpu as pltpu

NEG_SLOPE = 0.01   # nn.LeakyReLU default negative_slope
BN_EPS = 1e-5      # nn.BatchNorm2d default eps


# ---------------------------------------------------------------------------
# Fused kernel: conv1x1 (channel matmul) + folded BN(+0.25) + LeakyReLU + pool
# ---------------------------------------------------------------------------
def _transition_kernel(x_ref, w_ref, scale_ref, bias_ref, o_ref, r_scr):
    """One (batch, row-tile) step of the fused TransitionLayer.

    x_ref:     (2*TH, W, Cin)    input rows feeding TH pooled output rows
    w_ref:     (Cin, Cout)       1x1 conv weight
    scale_ref: (1, Cout)         folded BN scale * 0.25 (f32)
    bias_ref:  (1, Cout)         folded BN bias  * 0.25 (f32)
    o_ref:     (TH, W//2, Cout)  pooled output rows
    r_scr:     (CP, W, Cout)     f32 row-pair sums for ONE inner chunk (VMEM)
    """
    _, width, c_in = x_ref.shape
    th, w_out, c_out = o_ref.shape
    cp = r_scr.shape[0]            # pooled rows produced per inner chunk (static)
    n_chunks = th // cp

    w = w_ref[...]
    scale = scale_ref[...]
    bias = bias_ref[...]

    def chunk(c, carry):
        # 2*cp input image rows -> one matmul with ~256 M-rows; bounds the f32
        # live range independent of TH so TH can grow into the DMA-efficient
        # regime without blowing vreg/VMEM pressure.
        r0 = pl.multiple_of(c * (2 * cp), 2 * cp)
        x = x_ref[pl.ds(r0, 2 * cp), :, :].reshape(2 * cp * width, c_in)
        y = jnp.dot(x, w, preferred_element_type=jnp.float32)
        y = y * scale + bias                      # BN (0.25 pool factor folded in)
        y = jnp.where(y >= 0.0, y, NEG_SLOPE * y) # LeakyReLU
        y = y.reshape(cp, 2, width, c_out)

        # 2x2 stride-2 average pool:
        #  1) row-pair sums in registers (plain static indexing, no strides)
        r_scr[...] = y[:, 0, :, :] + y[:, 1, :, :]
        #  2) column-pair sums via stride-2 reads of the small chunk scratch
        pooled = (r_scr[:, pl.ds(0, w_out, stride=2), :]
                  + r_scr[:, pl.ds(1, w_out, stride=2), :])

        o0 = pl.multiple_of(c * cp, cp)
        o_ref[pl.ds(o0, cp), :, :] = pooled.astype(o_ref.dtype)
        return carry

    lax.fori_loop(0, n_chunks, chunk, None, unroll=n_chunks <= 8)


# ---------------------------------------------------------------------------
# Helpers
# ---------------------------------------------------------------------------
def fold_bn(gamma, beta, mean, var, eps=BN_EPS):
    scale = gamma / jnp.sqrt(var + eps)
    bias = beta - mean * scale
    return scale, bias


def _vmem_limit_bytes():
    """Generation-aware scoped-VMEM limit (v5e/v6e: 128 MiB physical, v7x: 64 MiB)."""
    try:
        cap = int(getattr(pltpu.get_tpu_info(), "vmem_capacity_bytes", 64 << 20))
    except Exception:
        cap = 64 << 20
    return max(min(cap * 3 // 4, 96 << 20), 32 << 20)


def _chunk_pairs(th, width):
    """Pooled rows per inner chunk so each matmul has ~256 M-rows."""
    target = max(1, 256 // max(2 * width, 1))
    best = 1
    for cp in range(1, th + 1):
        if th % cp == 0 and cp <= target:
            best = cp
    return best


def _pick_tiling(n, h_out, width, c_in, c_out, x_item, out_item, w_item,
                 budget_bytes):
    """Largest divisor-of-Hout row tile that fits the VMEM budget.

    Footprint counts the x2 double-buffering of the in/out pipeline blocks, the
    (double-buffered) weight/scale/bias blocks and the per-chunk intermediates.
    Also caps TH so the grid keeps >=4 steps when possible (v7x: 2 TensorCores
    + pipeline overlap; harmless on single-TC v5e/v6e).
    """
    w_out = width // 2
    per_row = 2 * (2 * width * c_in * x_item + w_out * c_out * out_item)
    fixed = (2 * c_in * c_out * w_item            # weight, double-buffered
             + 4 * c_out * 4                      # scale + bias
             + 256 * (c_in * x_item + 3 * c_out * 4))  # chunk live values + scratch
    cap = max(1, (budget_bytes - fixed) // max(per_row, 1))
    min_row_tiles = min(h_out, -(-4 // max(n, 1)))     # ceil(4 / n)
    cap = min(cap, max(1, h_out // min_row_tiles))
    th = 1
    for cand in range(1, h_out + 1):
        if h_out % cand == 0 and cand <= cap:
            th = cand
    # TODO(synk): pad/mask a ragged row tail instead of requiring TH | Hout
    #             (a prime Hout currently collapses to TH=1).
    return th, _chunk_pairs(th, width)


# ---------------------------------------------------------------------------
# Wrapper
# ---------------------------------------------------------------------------
def transition_layer_forward(x_nhwc, w, gamma, beta, mean, var, *,
                             eps=BN_EPS, tile_rows=None):
    """x_nhwc: (N,H,W,Cin); w: (Cin,Cout); BN params: (Cout,). Returns (N,H//2,W//2,Cout)."""
    N, H, W, Cin = x_nhwc.shape
    Cout = w.shape[1]

    # AvgPool2d(2, stride=2) drops a trailing odd row/column, like PyTorch.
    if (H % 2) or (W % 2):
        x_nhwc = x_nhwc[:, : (H // 2) * 2, : (W // 2) * 2, :]
        N, H, W, Cin = x_nhwc.shape
    assert H >= 2 and W >= 2, "AvgPool2d(2,2) needs at least 2x2 spatial input"
    Hout, Wout = H // 2, W // 2

    # Fold BN and the 0.25 pool factor into one f32 scale/bias epilogue
    # (LeakyReLU(0.25*z) == 0.25*LeakyReLU(z) since 0.25 > 0).
    scale, bias = fold_bn(gamma, beta, mean, var, eps)
    scale2 = (0.25 * scale).reshape(1, Cout).astype(jnp.float32)
    bias2 = (0.25 * bias).reshape(1, Cout).astype(jnp.float32)
    # NOTE: weights are used in their given dtype; pass bf16 x & w for the
    # bf16 HBM/MXU path (the layer is HBM-bound on all generations).

    x_item = jnp.dtype(x_nhwc.dtype).itemsize
    w_item = jnp.dtype(w.dtype).itemsize
    vmem_limit = _vmem_limit_bytes()
    budget = int(vmem_limit * 0.55)
    if tile_rows is None:
        TH, CP = _pick_tiling(N, Hout, W, Cin, Cout, x_item, x_item, w_item, budget)
    else:
        TH = tile_rows
        CP = _chunk_pairs(TH, W)
    assert Hout % TH == 0 and TH % CP == 0
    grid = (N, Hout // TH)

    out = pl.pallas_call(
        _transition_kernel,
        out_shape=jax.ShapeDtypeStruct((N, Hout, Wout, Cout), x_nhwc.dtype),
        grid_spec=pltpu.PrefetchScalarGridSpec(
            num_scalar_prefetch=0,
            grid=grid,
            in_specs=[
                pl.BlockSpec((pl.Squeezed(), 2 * TH, W, Cin),
                             lambda n, i: (n, i, 0, 0)),
                pl.BlockSpec((Cin, Cout), lambda n, i: (0, 0)),
                pl.BlockSpec((1, Cout), lambda n, i: (0, 0)),
                pl.BlockSpec((1, Cout), lambda n, i: (0, 0)),
            ],
            out_specs=pl.BlockSpec((pl.Squeezed(), TH, Wout, Cout),
                                   lambda n, i: (n, i, 0, 0)),
            scratch_shapes=[pltpu.VMEM((CP, W, Cout), jnp.float32)],
        ),
        compiler_params=pltpu.CompilerParams(
            dimension_semantics=("parallel", "parallel"),
            vmem_limit_bytes=vmem_limit),
    )(x_nhwc, w, scale2, bias2)
    return out


# ---------------------------------------------------------------------------
# Pure-JAX reference (same NHWC layout) for a sanity check
# ---------------------------------------------------------------------------
def transition_layer_reference(x_nhwc, w, gamma, beta, mean, var, eps=BN_EPS):
    scale, bias = fold_bn(gamma, beta, mean, var, eps)
    y = jnp.einsum("nhwc,cd->nhwd", x_nhwc.astype(jnp.float32),
                   w.astype(jnp.float32))
    y = y * scale + bias
    y = jnp.where(y >= 0.0, y, NEG_SLOPE * y)
    N, H, W, C = y.shape
    y = y.reshape(N, H // 2, 2, W // 2, 2, C).mean(axis=(2, 4))
    return y.astype(x_nhwc.dtype)


if __name__ == "__main__":
    # TransitionLayer(in_chans = layer_num * growth_rate, out_chans = num_feature * scale_factor)
    in_chans, out_chans = 8, 16
    N, H, W = 2, 16, 16

    key = jax.random.PRNGKey(0)
    kx, kw, kg, kb, km, kv = jax.random.split(key, 6)

    # NHWC activations (the PyTorch module is NCHW; channels-last is the TPU layout).
    x = jax.random.normal(kx, (N, H, W, in_chans), jnp.float32)
    # Conv2d(in_chans, out_chans, 1, bias=False): PyTorch weight (Cout,Cin,1,1) -> (Cin,Cout) here.
    w = 0.1 * jax.random.normal(kw, (in_chans, out_chans), jnp.float32)
    gamma = 1.0 + 0.1 * jax.random.normal(kg, (out_chans,), jnp.float32)
    beta = 0.1 * jax.random.normal(kb, (out_chans,), jnp.float32)
    mean = 0.1 * jax.random.normal(km, (out_chans,), jnp.float32)
    var = 1.0 + 0.1 * jax.random.uniform(kv, (out_chans,), jnp.float32)

    out = transition_layer_forward(x, w, gamma, beta, mean, var)
    out = jax.block_until_ready(out)
    assert out.shape == (N, H // 2, W // 2, out_chans), out.shape

    ref = jax.block_until_ready(
        transition_layer_reference(x, w, gamma, beta, mean, var))
    assert jnp.allclose(out, ref, rtol=1e-4, atol=1e-4), "mismatch vs reference"

    print("KERNEL_OK")
</pallas_src>

<mosaic_0001>
module attributes {stable_mosaic.version = 11 : i64} {
  func.func @_transition_kernel(%arg0: i32, %arg1: i32, %arg2: memref<1x8x16x8xf32, #tpu.memory_space<vmem>>, %arg3: memref<8x16xf32, #tpu.memory_space<vmem>>, %arg4: memref<1x16xf32, #tpu.memory_space<vmem>>, %arg5: memref<1x16xf32, #tpu.memory_space<vmem>>, %arg6: memref<1x4x8x16xf32, #tpu.memory_space<vmem>>, %arg7: memref<4x16x16xf32, #tpu.memory_space<vmem>>) attributes {dimension_semantics = [#tpu.dimension_semantics<parallel>, #tpu.dimension_semantics<parallel>], iteration_bounds = array<i64: 2, 2>, scalar_prefetch = 0 : i64, scratch_operands = 1 : i64, tpu.core_type = #tpu.core_type<tc>, window_params = [{transform_indices = @transform_0, window_bounds = array<i64: 1, 8, 16, 8>}, {pipeline_mode = #tpu.pipeline_mode<synchronous>, transform_indices = @transform_1, window_bounds = array<i64: 8, 16>}, {pipeline_mode = #tpu.pipeline_mode<synchronous>, transform_indices = @transform_2, window_bounds = array<i64: 1, 16>}, {pipeline_mode = #tpu.pipeline_mode<synchronous>, transform_indices = @transform_3, window_bounds = array<i64: 1, 16>}, {transform_indices = @transform_4, window_bounds = array<i64: 1, 4, 8, 16>}]} {
    %c0 = arith.constant 0 : index
    %c0_0 = arith.constant 0 : index
    %0 = vector.load %arg3[%c0, %c0_0] : memref<8x16xf32, #tpu.memory_space<vmem>>, vector<8x16xf32>
    %c0_1 = arith.constant 0 : index
    %c0_2 = arith.constant 0 : index
    %1 = vector.load %arg4[%c0_1, %c0_2] : memref<1x16xf32, #tpu.memory_space<vmem>>, vector<1x16xf32>
    %c0_3 = arith.constant 0 : index
    %c0_4 = arith.constant 0 : index
    %2 = vector.load %arg5[%c0_3, %c0_4] : memref<1x16xf32, #tpu.memory_space<vmem>>, vector<1x16xf32>
    %c0_i32 = arith.constant 0 : i32
    %c8_i32 = arith.constant 8 : i32
    %3 = arith.muli %c0_i32, %c8_i32 : i32
    %4 = tpu.assume_multiple %3, 8 : i32
    %c0_5 = arith.constant 0 : index
    %5 = arith.index_cast %4 : i32 to index
    %c0_6 = arith.constant 0 : index
    %c0_7 = arith.constant 0 : index
    %6 = vector.load %arg2[%c0_5, %5, %c0_6, %c0_7] : memref<1x8x16x8xf32, #tpu.memory_space<vmem>>, vector<1x8x16x8xf32>
    %7 = vector.shape_cast %6 : vector<1x8x16x8xf32> to vector<8x16x8xf32>
    %8 = vector.shape_cast %7 : vector<8x16x8xf32> to vector<128x8xf32>
    %cst = arith.constant dense<0.000000e+00> : vector<128x16xf32>
    %9 = tpu.matmul %8, %0, %cst {dimension_numbers = #tpu.dot_dimension_numbers<[1], [0], [0], [1], [0, 0, 1, 1], [], []>} : vector<128x8xf32>, vector<8x16xf32>, vector<128x16xf32> -> vector<128x16xf32>
    %10 = vector.broadcast %1 : vector<1x16xf32> to vector<128x16xf32>
    %11 = arith.mulf %9, %10 : vector<128x16xf32>
    %12 = vector.broadcast %2 : vector<1x16xf32> to vector<128x16xf32>
    %13 = arith.addf %11, %12 : vector<128x16xf32>
    %cst_8 = arith.constant 0.000000e+00 : f32
    %14 = vector.broadcast %cst_8 : f32 to vector<128x16xf32>
    %15 = arith.cmpf oge, %13, %14 : vector<128x16xf32>
    %cst_9 = arith.constant 0.00999999977 : f32
    %16 = vector.broadcast %cst_9 : f32 to vector<128x16xf32>
    %17 = arith.mulf %16, %13 : vector<128x16xf32>
    %18 = arith.select %15, %13, %17 : vector<128x16xi1>, vector<128x16xf32>
    %19 = vector.shape_cast %18 : vector<128x16xf32> to vector<4x2x16x16xf32>
    %20 = vector.extract_strided_slice %19 {offsets = [0, 0, 0, 0], sizes = [4, 1, 16, 16], strides = [1, 1, 1, 1]} : vector<4x2x16x16xf32> to vector<4x1x16x16xf32>
    %21 = vector.shape_cast %20 : vector<4x1x16x16xf32> to vector<4x16x16xf32>
    %22 = vector.extract_strided_slice %19 {offsets = [0, 1, 0, 0], sizes = [4, 1, 16, 16], strides = [1, 1, 1, 1]} : vector<4x2x16x16xf32> to vector<4x1x16x16xf32>
    %23 = vector.shape_cast %22 : vector<4x1x16x16xf32> to vector<4x16x16xf32>
    %24 = arith.addf %21, %23 : vector<4x16x16xf32>
    %c0_10 = arith.constant 0 : index
    %c0_11 = arith.constant 0 : index
    %c0_12 = arith.constant 0 : index
    %25 = vector.load %arg7[%c0_10, %c0_11, %c0_12] : memref<4x16x16xf32, #tpu.memory_space<vmem>>, vector<4x16x16xf32>
    tpu.vector_store %arg7[%c0_10, %c0_11, %c0_12], %24 {strides = array<i32>} : memref<4x16x16xf32, #tpu.memory_space<vmem>>, vector<4x16x16xf32>,
    %c0_13 = arith.constant 0 : index
    %c0_14 = arith.constant 0 : index
    %c0_15 = arith.constant 0 : index
    %26 = tpu.strided_load %arg7[%c0_13, %c0_14, %c0_15] {strides = array<i32: 1, 2, 1>} : memref<4x16x16xf32, #tpu.memory_space<vmem>>, vector<4x8x16xf32>
    %c0_16 = arith.constant 0 : index
    %c1 = arith.constant 1 : index
    %c0_17 = arith.constant 0 : index
    %27 = tpu.strided_load %arg7[%c0_16, %c1, %c0_17] {strides = array<i32: 1, 2, 1>} : memref<4x16x16xf32, #tpu.memory_space<vmem>>, vector<4x8x16xf32>
    %28 = arith.addf %26, %27 : vector<4x8x16xf32>
    %c4_i32 = arith.constant 4 : i32
    %29 = arith.muli %c0_i32, %c4_i32 : i32
    %30 = tpu.assume_multiple %29, 4 : i32
    %c0_18 = arith.constant 0 : index
    %31 = arith.index_cast %30 : i32 to index
    %c0_19 = arith.constant 0 : index
    %c0_20 = arith.constant 0 : index
    %32 = vector.load %arg6[%c0_18, %31, %c0_19, %c0_20] : memref<1x4x8x16xf32, #tpu.memory_space<vmem>>, vector<1x4x8x16xf32>
    %33 = vector.shape_cast %32 : vector<1x4x8x16xf32> to vector<4x8x16xf32>
    %34 = vector.shape_cast %28 : vector<4x8x16xf32> to vector<1x4x8x16xf32>
    tpu.vector_store %arg6[%c0_18, %31, %c0_19, %c0_20], %34 {strides = array<i32>} : memref<1x4x8x16xf32, #tpu.memory_space<vmem>>, vector<1x4x8x16xf32>,
    %c1_i32 = arith.constant 1 : i32
    return
  }
  func.func @transform_0(%arg0: i32, %arg1: i32) -> (i32, i32, i32, i32) {
    %c0_i32 = arith.constant 0 : i32
    %c0_i32_0 = arith.constant 0 : i32
    %c0_i32_1 = arith.constant 0 : i32
    return %arg0, %arg1, %c0_i32, %c0_i32_0 : i32, i32, i32, i32
  }
  func.func @transform_1(%arg0: i32, %arg1: i32) -> (i32, i32) {
    %c0_i32 = arith.constant 0 : i32
    %c0_i32_0 = arith.constant 0 : i32
    %c0_i32_1 = arith.constant 0 : i32
    return %c0_i32, %c0_i32_0 : i32, i32
  }
  func.func @transform_2(%arg0: i32, %arg1: i32) -> (i32, i32) {
    %c0_i32 = arith.constant 0 : i32
    %c0_i32_0 = arith.constant 0 : i32
    %c0_i32_1 = arith.constant 0 : i32
    return %c0_i32, %c0_i32_0 : i32, i32
  }
  func.func @transform_3(%arg0: i32, %arg1: i32) -> (i32, i32) {
    %c0_i32 = arith.constant 0 : i32
    %c0_i32_0 = arith.constant 0 : i32
    %c0_i32_1 = arith.constant 0 : i32
    return %c0_i32, %c0_i32_0 : i32, i32
  }
  func.func @transform_4(%arg0: i32, %arg1: i32) -> (i32, i32, i32, i32) {
    %c0_i32 = arith.constant 0 : i32
    %c0_i32_0 = arith.constant 0 : i32
    %c0_i32_1 = arith.constant 0 : i32
    return %arg0, %arg1, %c0_i32, %c0_i32_0 : i32, i32, i32, i32
  }
}

</mosaic_0001>

<llo_original>
// kernel: tpu_custom_call.1
$region0: #{tpu_custom_call.1}
  #allocation0 [shape = 'u32[]', space=smem, size = 0x4, offset = 0x4, fixed_abs, tag = 'smem constant byte address 0x4 - core index']
  #allocation1 [shape = 'u32[144,128]{1,0:T(1,128)}', space=vmem, size = 0x12000, scoped, tag = 'internal scratch']
  #allocation2 [shape = 'f32[4,16,16]{2,1,0:T(8,128)}', space=vmem, size = 0x8000, scoped, tag = 'scratch operand']
  %s0 = inlined_call_operand.vmem [shape: f32[2,16,16,8], index: 0, kind: input, shape index: {}]
  %s1 = inlined_call_operand.vmem [shape: f32[8,16], index: 1, kind: input, shape index: {}]
  %s2 = inlined_call_operand.vmem [shape: f32[1,16], index: 2, kind: input, shape index: {}]
  %s3 = inlined_call_operand.vmem [shape: f32[1,16], index: 3, kind: input, shape index: {}]
  %s4 = inlined_call_operand.hbm [shape: f32[2,8,8,16], index: 4, kind: output, shape index: {}]
  %s5 = sld [smem:[#allocation0]]
  $region49: #{tpu_custom_call.1} parent=0
    _
  %s7 = ssub.s32 1, %s5
  %s8 = scalar_select 0, %s7, %s5
  $region1: #{tpu_custom_call.1} parent=0
    #allocation3 [shape = 'u8[32768]{0}', space=vmem, size = 0x8000, scoped, tag = 'output window, operand 0']
    #allocation4 [shape = 's32[2]{0}', space=sflag, size = 0x8, scoped, tag = 'scoped memory for tpu_custom_call.1']
    %9 = vsyncpa [#allocation4], 0
    %s10 = scalar_lea.sflag [#allocation4], 1
    %11 = vsyncpa %s10, 0
    loop: start=0, step=1, limit=6
    $region2: #{tpu_custom_call.1} parent=1 // loop_pre_header
      _
    $region3: #{tpu_custom_call.1} parent=1 // loop_header
      %s13 = sphi 0, %s17
      %p14 = scmp.ge.s32.totalorder %s13, 6
      %s20 = sphi 0, %s32
      %s21 = sphi 0, %s28
      %s22 = sphi 0, %s20
      %s23 = sphi 0, %s21
      %s24 = sphi 0, %s22
      %s25 = sphi 0, %s23
      %s37 = sphi 0, %s39
      %s40 = sphi 0, %s37
      %s41 = sphi 0, %s40
      %s57 = sphi 0, %s41
      %s61 = sphi 0, %s61
      %s63 = sphi 0, %s61
      %s64 = sphi 0, %s63
      %s78 = sphi 0, %s64
      %s82 = sphi 0, %s82
      %s84 = sphi 0, %s82
      %s85 = sphi 0, %s84
      %s99 = sphi 0, %s85
      %s103 = sphi 0, %s103
      %s105 = sphi 0, %s103
      %s106 = sphi 0, %s105
      %s120 = sphi 0, %s106
      %s128 = sphi 0, %s130
      %s131 = sphi 0, %s128
      %s132 = sphi 0, %s131
      %s148 = sphi 0, %s132
    $region4: #{tpu_custom_call.1} parent=1 // loop_header_branch
      %16 = sbr.rel (%p14) target = $region8
    $region5: #{tpu_custom_call.1} parent=1 // loop_body
      %s18 = ssub.s32 %s13, 1
      %s19 = ssub.s32 %s13, 2
      %s26 = sadd.s32 1, %s21
      %p27 = scmp.ge.s32.totalorder %s26, 2
      %s28 = scalar_select %p27, 0, %s26
      %s29 = sadd.s32 1, %s20
      %s30 = scalar_select %p27, %s29, %s20
      %p31 = scmp.ge.s32.totalorder %s30, 2
      %s32 = scalar_select %p31, 0, %s30
      %s33 = ssub.s32 %s20, %s32
      %s34 = ssub.s32 %s21, %s28
      %s35 = sor.u32 %s33, %s34
      %p36 = scmp.eq.s32.totalorder %s35, 0
      %s38 = sadd.s32 %s37, 1
      %s39 = scalar_select %p36, %s37, %s38
      %p42 = pneg %p36
      %p43 = scmp.eq.s32.totalorder %s13, 3
      %p44 = por %p42, %p43
      %p45 = scmp.ne.s32.totalorder %s37, %s40
      %p46 = scmp.eq.s32.totalorder %s13, 0
      %p47 = por %p45, %p46
      %p48 = scmp.ne.s32.totalorder %s37, %s40
      %p49 = scmp.eq.s32.totalorder %s18, 3
      %p50 = por %p48, %p49
      %p51 = scmp.ne.s32.totalorder %s40, %s41
      %p52 = scmp.eq.s32.totalorder %s18, 0
      %p53 = por %p51, %p52
      %p54 = scmp.ne.s32.totalorder %s40, %s41
      %p55 = scmp.eq.s32.totalorder %s19, 3
      %p56 = por %p54, %p55
      %p58 = scmp.ne.s32.totalorder %s41, %s57
      %p59 = scmp.eq.s32.totalorder %s19, 0
      %p60 = por %p58, %p59
      %s62 = sadd.s32 %s61, 1
      %p65 = scmp.eq.s32.totalorder %s13, 3
      %p66 = scmp.ne.s32.totalorder %s61, %s63
      %p67 = scmp.eq.s32.totalorder %s13, 0
      %p68 = por %p66, %p67
      %p69 = scmp.ne.s32.totalorder %s61, %s63
      %p70 = scmp.eq.s32.totalorder %s18, 3
      %p71 = por %p69, %p70
      %p72 = scmp.ne.s32.totalorder %s63, %s64
      %p73 = scmp.eq.s32.totalorder %s18, 0
      %p74 = por %p72, %p73
      %p75 = scmp.ne.s32.totalorder %s63, %s64
      %p76 = scmp.eq.s32.totalorder %s19, 3
      %p77 = por %p75, %p76
      %p79 = scmp.ne.s32.totalorder %s64, %s78
      %p80 = scmp.eq.s32.totalorder %s19, 0
      %p81 = por %p79, %p80
      %s83 = sadd.s32 %s82, 1
      %p86 = scmp.eq.s32.totalorder %s13, 3
      %p87 = scmp.ne.s32.totalorder %s82, %s84
      %p88 = scmp.eq.s32.totalorder %s13, 0
      %p89 = por %p87, %p88
      %p90 = scmp.ne.s32.totalorder %s82, %s84
      %p91 = scmp.eq.s32.totalorder %s18, 3
      %p92 = por %p90, %p91
      %p93 = scmp.ne.s32.totalorder %s84, %s85
      %p94 = scmp.eq.s32.totalorder %s18, 0
      %p95 = por %p93, %p94
      %p96 = scmp.ne.s32.totalorder %s84, %s85
      %p97 = scmp.eq.s32.totalorder %s19, 3
      %p98 = por %p96, %p97
      %p100 = scmp.ne.s32.totalorder %s85, %s99
      %p101 = scmp.eq.s32.totalorder %s19, 0
      %p102 = por %p100, %p101
      %s104 = sadd.s32 %s103, 1
      %p107 = scmp.eq.s32.totalorder %s13, 3
      %p108 = scmp.ne.s32.totalorder %s103, %s105
      %p109 = scmp.eq.s32.totalorder %s13, 0
      %p110 = por %p108, %p109
      %p111 = scmp.ne.s32.totalorder %s103, %s105
      %p112 = scmp.eq.s32.totalorder %s18, 3
      %p113 = por %p111, %p112
      %p114 = scmp.ne.s32.totalorder %s105, %s106
      %p115 = scmp.eq.s32.totalorder %s18, 0
      %p116 = por %p114, %p115
      %p117 = scmp.ne.s32.totalorder %s105, %s106
      %p118 = scmp.eq.s32.totalorder %s19, 3
      %p119 = por %p117, %p118
      %p121 = scmp.ne.s32.totalorder %s106, %s120
      %p122 = scmp.eq.s32.totalorder %s19, 0
      %p123 = por %p121, %p122
      %s124 = ssub.s32 %s20, %s32
      %s125 = ssub.s32 %s21, %s28
      %s126 = sor.u32 %s124, %s125
      %p127 = scmp.eq.s32.totalorder %s126, 0
      %s129 = sadd.s32 %s128, 1
      %s130 = scalar_select %p127, %s128, %s129
      %p133 = pneg %p127
      %p134 = scmp.eq.s32.totalorder %s13, 3
      %p135 = por %p133, %p134
      %p136 = scmp.ne.s32.totalorder %s128, %s131
      %p137 = scmp.eq.s32.totalorder %s13, 0
      %p138 = por %p136, %p137
      %p139 = scmp.ne.s32.totalorder %s128, %s131
      %p140 = scmp.eq.s32.totalorder %s18, 3
      %p141 = por %p139, %p140
      %p142 = scmp.ne.s32.totalorder %s131, %s132
      %p143 = scmp.eq.s32.totalorder %s18, 0
      %p144 = por %p142, %p143
      %p145 = scmp.ne.s32.totalorder %s131, %s132
      %p146 = scmp.eq.s32.totalorder %s19, 3
      %p147 = por %p145, %p146
      %p149 = scmp.ne.s32.totalorder %s132, %s148
      %p150 = scmp.eq.s32.totalorder %s19, 0
      %p151 = por %p149, %p150
      %p152 = scmp.le.s32.totalorder 1, %s13
      %p153 = scmp.lt.s32.totalorder %s13, 5
      %p154 = pnand %p152, %p153
      %p155 = pneg %p154
      // Predicated region
      $region9: #{tpu_custom_call.1} parent=5 // pred_check
        _
      $region10: #{tpu_custom_call.1} parent=5 // pred_check_branch
        %157 = sbr.rel (%p154) target = $region12
      $region11: #{tpu_custom_call.1} parent=5 // pred_region
        %s158 = ssub.s32 %s13, 1
        // Predicated region
        $region13: #{tpu_custom_call.1} parent=11 // pred_check
          %p159 = pneg %p74
        $region14: #{tpu_custom_call.1} parent=11 // pred_check_branch
          %161 = sbr.rel (%p159) target = $region16
        $region15: #{tpu_custom_call.1} parent=11 // pred_region
          _
        $region16: #{tpu_custom_call.1} parent=11 // pred_fallthru
          _
        // Predicated region
        $region17: #{tpu_custom_call.1} parent=11 // pred_check
          %p162 = pneg %p95
        $region18: #{tpu_custom_call.1} parent=11 // pred_check_branch
          %164 = sbr.rel (%p162) target = $region20
        $region19: #{tpu_custom_call.1} parent=11 // pred_region
          _
        $region20: #{tpu_custom_call.1} parent=11 // pred_fallthru
          _
        // Predicated region
        $region21: #{tpu_custom_call.1} parent=11 // pred_check
          %p165 = pneg %p116
        $region22: #{tpu_custom_call.1} parent=11 // pred_check_branch
          %167 = sbr.rel (%p165) target = $region24
        $region23: #{tpu_custom_call.1} parent=11 // pred_region
          _
        $region24: #{tpu_custom_call.1} parent=11 // pred_fallthru
          _
      $region12: #{tpu_custom_call.1} parent=5 // pred_fallthru
        _
      %p168 = scmp.lt.s32.totalorder %s13, 4
      // Predicated region
      $region25: #{tpu_custom_call.1} parent=5 // pred_check
        %p169 = pneg %p168
      $region26: #{tpu_custom_call.1} parent=5 // pred_check_branch
        %171 = sbr.rel (%p169) target = $region28
      $region27: #{tpu_custom_call.1} parent=5 // pred_region
        // Predicated region
        $region29: #{tpu_custom_call.1} parent=27 // pred_check
          %p172 = pneg %p47
        $region30: #{tpu_custom_call.1} parent=27 // pred_check_branch
          %174 = sbr.rel (%p172) target = $region32
        $region31: #{tpu_custom_call.1} parent=27 // pred_region
          %s175 = smul.u32 8, %s21
          %p176 = scmp.lt.s32.totalorder %s20, 1
          %s177 = scalar_select %p176, %s20, 1
          %p178 = scmp.lt.s32.totalorder %s175, 15
          %s179 = scalar_select %p178, %s175, 15
          %s180 = smul.addr %s179, 2
          %s181 = smul.addr %s177, 32
          %s182 = sadd.s32 %s180, %s181
          %s183 = smul.addr %s182, 8
          %s184 = scalar_lea.vmem %s0, %s183
          %s185 = smul.u32 8, %s21
        $region32: #{tpu_custom_call.1} parent=27 // pred_fallthru
          _
      $region28: #{tpu_custom_call.1} parent=5 // pred_fallthru
        _
      %p186 = scmp.le.s32.totalorder 1, %s13
      %p187 = scmp.lt.s32.totalorder %s13, 5
      %p188 = pnand %p186, %p187
      %p189 = pneg %p188
      // Predicated region
      $region33: #{tpu_custom_call.1} parent=5 // pred_check
        _
      $region34: #{tpu_custom_call.1} parent=5 // pred_check_branch
        %191 = sbr.rel (%p188) target = $region36
      $region35: #{tpu_custom_call.1} parent=5 // pred_region
        %s192 = ssub.s32 %s13, 1
        %s193 = smul.u32 8, %s23
        %p194 = scmp.lt.s32.totalorder %s22, 1
        %s195 = scalar_select %p194, %s22, 1
        %p196 = scmp.lt.s32.totalorder %s193, 15
        %s197 = scalar_select %p196, %s193, 15
        %s198 = smul.addr %s197, 2
        %s199 = smul.addr %s195, 32
        %s200 = sadd.s32 %s198, %s199
        %s201 = smul.addr %s200, 8
        %s202 = scalar_lea.vmem %s0, %s201
        %p203 = pneg %p53
        %p204 = pneg %p50
        %p205 = pneg %p74
        %p206 = pneg %p71
        %p207 = pneg %p95
        %p208 = pneg %p92
        %p209 = pneg %p116
        %p210 = pneg %p113
        %p211 = pneg %p144
        %p212 = pneg %p141
        %s213 = sand.u32 %s131, 1
        %s214 = scalar_lea.sflag [#allocation4], %s213
        %s215 = sand.u32 %s131, 1
        %s216 = smul.addr %s215, 32
        %s217 = scalar_lea.vmem [#allocation3], %s216
        %s218 = smul.u32 8, %s23
        %p219 = scmp.lt.s32.totalorder %s22, 1
        %s220 = scalar_select %p219, %s22, 1
        %p221 = scmp.lt.s32.totalorder %s218, 15
        %s222 = scalar_select %p221, %s218, 15
        %s223 = smul.addr %s222, 2
        %s224 = smul.addr %s220, 32
        %s225 = sadd.s32 %s223, %s224
        %s226 = smul.addr %s225, 8
        %s227 = scalar_lea.vmem %s0, %s226
        %s228 = smul.u32 8, %s23
        %s229 = smul.u32 4, %s23
        %v230 = vld [vmem:[%s1] sm:$0xff]
        %v231 = vld [vmem:[%s2] sm:$0x1]
        %v232 = vld [vmem:[%s3] sm:$0x1]
        %s233 = smul.u32 0, 16
        %s234 = scalar_lea.vmem %s227, %s233
        %v235 = vld [vmem:[%s234] sm:$0xff]
        %v236 = vld [vmem:[%s234 + $0x8] sm:$0xff]
        %v237 = vld [vmem:[%s234 + $0x10] sm:$0xff]
        %v238 = vld [vmem:[%s234 + $0x18] sm:$0xff]
        %v239 = vld [vmem:[%s234 + $0x20] sm:$0xff]
        %v240 = vld [vmem:[%s234 + $0x28] sm:$0xff]
        %v241 = vld [vmem:[%s234 + $0x30] sm:$0xff]
        %v242 = vld [vmem:[%s234 + $0x38] sm:$0xff]
        %v243 = vld [vmem:[%s234 + $0x40] sm:$0xff]
        %v244 = vld [vmem:[%s234 + $0x48] sm:$0xff]
        %v245 = vld [vmem:[%s234 + $0x50] sm:$0xff]
        %v246 = vld [vmem:[%s234 + $0x58] sm:$0xff]
        %v247 = vld [vmem:[%s234 + $0x60] sm:$0xff]
        %v248 = vld [vmem:[%s234 + $0x68] sm:$0xff]
        %v249 = vld [vmem:[%s234 + $0x70] sm:$0xff]
        %v250 = vld [vmem:[%s234 + $0x78] sm:$0xff]
        %vm251 = vcmask 64512
        %v253 = vsel %vm251, %v235, 0
        %v256 = vsel %vm251, %v236, 0
        %v259 = vsel %vm251, %v237, 0
        %v262 = vsel %vm251, %v238, 0
        %v265 = vsel %vm251, %v239, 0
        %v268 = vsel %vm251, %v240, 0
        %v271 = vsel %vm251, %v241, 0
        %v274 = vsel %vm251, %v242, 0
        %v277 = vsel %vm251, %v243, 0
        %v280 = vsel %vm251, %v244, 0
        %v283 = vsel %vm251, %v245, 0
        %v286 = vsel %vm251, %v246, 0
        %v289 = vsel %vm251, %v247, 0
        %v292 = vsel %vm251, %v248, 0
        %v295 = vsel %vm251, %v249, 0
        %v298 = vsel %vm251, %v250, 0
        %300 = vmatprep.subr.mxu0 0.0
        %301 = vmatpush1.msra.mxu0 0.0
        %302 = vmatprep.subr.mxu0 0.0
        %303 = vmatpush1.msra.mxu0 0.0
        %304 = vmatprep.subr.mxu0 0.0
        %305 = vmatpush1.msra.mxu0 0.0
        %306 = vmatprep.subr.mxu0 0.0
        %307 = vmatpush1.msra.mxu0 0.0
        %308 = vmatprep.subr.mxu0 0.0
        %309 = vmatpush1.msra.mxu0 0.0
        %310 = vmatprep.subr.mxu0 0.0
        %311 = vmatpush1.msra.mxu0 0.0
        %312 = vmatprep.subr.mxu0 0.0
        %313 = vmatpush1.msra.mxu0 0.0
        %314 = vmatprep.subr.mxu0 0.0
        %315 = vmatpush1.msra.mxu0 0.0
        %316 = vmatprep.subr.mxu0 0.0
        %317 = vmatpush1.msra.mxu0 0.0
        %318 = vmatprep.subr.mxu0 0.0
        %319 = vmatpush1.msra.mxu0 0.0
        %320 = vmatprep.subr.mxu0 0.0
        %321 = vmatpush1.msra.mxu0 0.0
        %322 = vmatprep.subr.mxu0 0.0
        %323 = vmatpush1.msra.mxu0 0.0
        %324 = vmatprep.subr.mxu0 0.0
        %325 = vmatpush1.msra.mxu0 0.0
        %326 = vmatprep.subr.mxu0 0.0
        %327 = vmatpush1.msra.mxu0 0.0
        %328 = vmatprep.subr.mxu0 0.0
        %329 = vmatpush1.msra.mxu0 0.0
        %330 = vmatprep.subr.mxu0 0.0
        %331 = vmatpush1.msra.mxu0 %v230
        %332 = vmatprep.subr.mxu0 0.0
        %333 = vmatpush2.msra.mxu0 0.0
        %334 = vmatprep.subr.mxu0 0.0
        %335 = vmatpush2.msra.mxu0 0.0
        %336 = vmatprep.subr.mxu0 0.0
        %337 = vmatpush2.msra.mxu0 0.0
        %338 = vmatprep.subr.mxu0 0.0
        %339 = vmatpush2.msra.mxu0 0.0
        %340 = vmatprep.subr.mxu0 0.0
        %341 = vmatpush2.msra.mxu0 0.0
        %342 = vmatprep.subr.mxu0 0.0
        %343 = vmatpush2.msra.mxu0 0.0
        %344 = vmatprep.subr.mxu0 0.0
        %345 = vmatpush2.msra.mxu0 0.0
        %346 = vmatprep.subr.mxu0 0.0
        %347 = vmatpush2.msra.mxu0 0.0
        %348 = vmatprep.subr.mxu0 0.0
        %349 = vmatpush2.msra.mxu0 0.0
        %350 = vmatprep.subr.mxu0 0.0
        %351 = vmatpush2.msra.mxu0 0.0
        %352 = vmatprep.subr.mxu0 0.0
        %353 = vmatpush2.msra.mxu0 0.0
        %354 = vmatprep.subr.mxu0 0.0
        %355 = vmatpush2.msra.mxu0 0.0
        %356 = vmatprep.subr.mxu0 0.0
        %357 = vmatpush2.msra.mxu0 0.0
        %358 = vmatprep.subr.mxu0 0.0
        %359 = vmatpush2.msra.mxu0 0.0
        %360 = vmatprep.subr.mxu0 0.0
        %361 = vmatpush2.msra.mxu0 0.0
        %362 = vmatprep.subr.mxu0 0.0
        %363 = vmatpush2.msra.mxu0 0.0
        %364 = vmatprep.mubr.f32.mxu0 0.0
        %365 = vmatmul.mubr.f32.gmra.mxu0 %v253
        %v366 = vpop.f32.mrf.mxu0
        %v367 = vadd.f32 0.0, %v366
        %v368 = vpop.f32.mrf.mxu0
        %369 = vmatprep.mubr.f32.mxu0 0.0
        %370 = vmatmul.mubr.f32.gmra.mxu0 %v256
        %v371 = vpop.f32.mrf.mxu0
        %v372 = vadd.f32 0.0, %v371
        %v373 = vpop.f32.mrf.mxu0
        %374 = vmatprep.mubr.f32.mxu0 0.0
        %375 = vmatmul.mubr.f32.gmra.mxu0 %v259
        %v376 = vpop.f32.mrf.mxu0
        %v377 = vadd.f32 0.0, %v376
        %v378 = vpop.f32.mrf.mxu0
        %379 = vmatprep.mubr.f32.mxu0 0.0
        %380 = vmatmul.mubr.f32.gmra.mxu0 %v262
        %v381 = vpop.f32.mrf.mxu0
        %v382 = vadd.f32 0.0, %v381
        %v383 = vpop.f32.mrf.mxu0
        %384 = vmatprep.mubr.f32.mxu0 0.0
        %385 = vmatmul.mubr.f32.gmra.mxu0 %v265
        %v386 = vpop.f32.mrf.mxu0
        %v387 = vadd.f32 0.0, %v386
        %v388 = vpop.f32.mrf.mxu0
        %389 = vmatprep.mubr.f32.mxu0 0.0
        %390 = vmatmul.mubr.f32.gmra.mxu0 %v268
        %v391 = vpop.f32.mrf.mxu0
        %v392 = vadd.f32 0.0, %v391
        %v393 = vpop.f32.mrf.mxu0
        %394 = vmatprep.mubr.f32.mxu0 0.0
        %395 = vmatmul.mubr.f32.gmra.mxu0 %v271
        %v396 = vpop.f32.mrf.mxu0
        %v397 = vadd.f32 0.0, %v396
        %v398 = vpop.f32.mrf.mxu0
        %399 = vmatprep.mubr.f32.mxu0 0.0
        %400 = vmatmul.mubr.f32.gmra.mxu0 %v274
        %v401 = vpop.f32.mrf.mxu0
        %v402 = vadd.f32 0.0, %v401
        %v403 = vpop.f32.mrf.mxu0
        %404 = vmatprep.mubr.f32.mxu0 0.0
        %405 = vmatmul.mubr.f32.gmra.mxu0 %v277
        %v406 = vpop.f32.mrf.mxu0
        %v407 = vadd.f32 0.0, %v406
        %v408 = vpop.f32.mrf.mxu0
        %409 = vmatprep.mubr.f32.mxu0 0.0
        %410 = vmatmul.mubr.f32.gmra.mxu0 %v280
        %v411 = vpop.f32.mrf.mxu0
        %v412 = vadd.f32 0.0, %v411
        %v413 = vpop.f32.mrf.mxu0
        %414 = vmatprep.mubr.f32.mxu0 0.0
        %415 = vmatmul.mubr.f32.gmra.mxu0 %v283
        %v416 = vpop.f32.mrf.mxu0
        %v417 = vadd.f32 0.0, %v416
        %v418 = vpop.f32.mrf.mxu0
        %419 = vmatprep.mubr.f32.mxu0 0.0
        %420 = vmatmul.mubr.f32.gmra.mxu0 %v286
        %v421 = vpop.f32.mrf.mxu0
        %v422 = vadd.f32 0.0, %v421
        %v423 = vpop.f32.mrf.mxu0
        %424 = vmatprep.mubr.f32.mxu0 0.0
        %425 = vmatmul.mubr.f32.gmra.mxu0 %v289
        %v426 = vpop.f32.mrf.mxu0
        %v427 = vadd.f32 0.0, %v426
        %v428 = vpop.f32.mrf.mxu0
        %429 = vmatprep.mubr.f32.mxu0 0.0
        %430 = vmatmul.mubr.f32.gmra.mxu0 %v292
        %v431 = vpop.f32.mrf.mxu0
        %v432 = vadd.f32 0.0, %v431
        %v433 = vpop.f32.mrf.mxu0
        %434 = vmatprep.mubr.f32.mxu0 0.0
        %435 = vmatmul.mubr.f32.gmra.mxu0 %v295
        %v436 = vpop.f32.mrf.mxu0
        %v437 = vadd.f32 0.0, %v436
        %v438 = vpop.f32.mrf.mxu0
        %439 = vmatprep.mubr.f32.mxu0 0.0
        %440 = vmatmul.mubr.f32.gmra.mxu0 %v298
        %v441 = vpop.f32.mrf.mxu0
        %v442 = vadd.f32 0.0, %v441
        %v443 = vpop.f32.mrf.mxu0
        %444 = vdwg.mxu0
        %v446 = vlaneseq
        %v447 = vshrl.u32 %v446, 7
        %v448 = vsub.s32 0, %v447
        %v449 = vrot.slane %v231, %v448
        %v451 = vmul.f32 %v367, %v449
        %v452 = vmul.f32 %v372, %v449
        %v453 = vmul.f32 %v377, %v449
        %v454 = vmul.f32 %v382, %v449
        %v455 = vmul.f32 %v387, %v449
        %v456 = vmul.f32 %v392, %v449
        %v457 = vmul.f32 %v397, %v449
        %v458 = vmul.f32 %v402, %v449
        %v459 = vmul.f32 %v407, %v449
        %v460 = vmul.f32 %v412, %v449
        %v461 = vmul.f32 %v417, %v449
        %v462 = vmul.f32 %v422, %v449
        %v463 = vmul.f32 %v427, %v449
        %v464 = vmul.f32 %v432, %v449
        %v465 = vmul.f32 %v437, %v449
        %v466 = vmul.f32 %v442, %v449
        %v468 = vlaneseq
        %v469 = vshrl.u32 %v468, 7
        %v470 = vsub.s32 0, %v469
        %v471 = vrot.slane %v232, %v470
        %v473 = vadd.f32 %v451, %v471
        %v474 = vadd.f32 %v452, %v471
        %v475 = vadd.f32 %v453, %v471
        %v476 = vadd.f32 %v454, %v471
        %v477 = vadd.f32 %v455, %v471
        %v478 = vadd.f32 %v456, %v471
        %v479 = vadd.f32 %v457, %v471
        %v480 = vadd.f32 %v458, %v471
        %v481 = vadd.f32 %v459, %v471
        %v482 = vadd.f32 %v460, %v471
        %v483 = vadd.f32 %v461, %v471
        %v484 = vadd.f32 %v462, %v471
        %v485 = vadd.f32 %v463, %v471
        %v486 = vadd.f32 %v464, %v471
        %v487 = vadd.f32 %v465, %v471
        %v488 = vadd.f32 %v466, %v471
        %vm489 = vcmp.ge.f32.partialorder %v473, 0.0
        %vm490 = vcmp.ge.f32.partialorder %v474, 0.0
        %vm491 = vcmp.ge.f32.partialorder %v475, 0.0
        %vm492 = vcmp.ge.f32.partialorder %v476, 0.0
        %vm493 = vcmp.ge.f32.partialorder %v477, 0.0
        %vm494 = vcmp.ge.f32.partialorder %v478, 0.0
        %vm495 = vcmp.ge.f32.partialorder %v479, 0.0
        %vm496 = vcmp.ge.f32.partialorder %v480, 0.0
        %vm497 = vcmp.ge.f32.partialorder %v481, 0.0
        %vm498 = vcmp.ge.f32.partialorder %v482, 0.0
        %vm499 = vcmp.ge.f32.partialorder %v483, 0.0
        %vm500 = vcmp.ge.f32.partialorder %v484, 0.0
        %vm501 = vcmp.ge.f32.partialorder %v485, 0.0
        %vm502 = vcmp.ge.f32.partialorder %v486, 0.0
        %vm503 = vcmp.ge.f32.partialorder %v487, 0.0
        %vm504 = vcmp.ge.f32.partialorder %v488, 0.0
        %v505 = vmul.f32 %v473, 0.01
        %v506 = vmul.f32 %v474, 0.01
        %v507 = vmul.f32 %v475, 0.01
        %v508 = vmul.f32 %v476, 0.01
        %v509 = vmul.f32 %v477, 0.01
        %v510 = vmul.f32 %v478, 0.01
        %v511 = vmul.f32 %v479, 0.01
        %v512 = vmul.f32 %v480, 0.01
        %v513 = vmul.f32 %v481, 0.01
        %v514 = vmul.f32 %v482, 0.01
        %v515 = vmul.f32 %v483, 0.01
        %v516 = vmul.f32 %v484, 0.01
        %v517 = vmul.f32 %v485, 0.01
        %v518 = vmul.f32 %v486, 0.01
        %v519 = vmul.f32 %v487, 0.01
        %v520 = vmul.f32 %v488, 0.01
        %v521 = vsel %vm489, %v473, %v505
        %v522 = vsel %vm490, %v474, %v506
        %v523 = vsel %vm491, %v475, %v507
        %v524 = vsel %vm492, %v476, %v508
        %v525 = vsel %vm493, %v477, %v509
        %v526 = vsel %vm494, %v478, %v510
        %v527 = vsel %vm495, %v479, %v511
        %v528 = vsel %vm496, %v480, %v512
        %v529 = vsel %vm497, %v481, %v513
        %v530 = vsel %vm498, %v482, %v514
        %v531 = vsel %vm499, %v483, %v515
        %v532 = vsel %vm500, %v484, %v516
        %v533 = vsel %vm501, %v485, %v517
        %v534 = vsel %vm502, %v486, %v518
        %v535 = vsel %vm503, %v487, %v519
        %v536 = vsel %vm504, %v488, %v520
        %v537 = vadd.f32 %v521, %v523
        %v538 = vadd.f32 %v522, %v524
        %v539 = vadd.f32 %v525, %v527
        %v540 = vadd.f32 %v526, %v528
        %v541 = vadd.f32 %v529, %v531
        %v542 = vadd.f32 %v530, %v532
        %v543 = vadd.f32 %v533, %v535
        %v544 = vadd.f32 %v534, %v536
        %vm545 = vcmask 130048
        %546 = vst.msk [vmem:[#allocation2] sm:$0xff] %vm545, %v537
        %547 = vst.msk [vmem:[#allocation2 + $0x8] sm:$0xff] %vm545, %v538
        %548 = vst.msk [vmem:[#allocation2 + $0x10] sm:$0xff] %vm545, %v539
        %549 = vst.msk [vmem:[#allocation2 + $0x18] sm:$0xff] %vm545, %v540
        %550 = vst.msk [vmem:[#allocation2 + $0x20] sm:$0xff] %vm545, %v541
        %551 = vst.msk [vmem:[#allocation2 + $0x28] sm:$0xff] %vm545, %v542
        %552 = vst.msk [vmem:[#allocation2 + $0x30] sm:$0xff] %vm545, %v543
        %553 = vst.msk [vmem:[#allocation2 + $0x38] sm:$0xff] %vm545, %v544
        %v554 = vld [vmem:[#allocation2] ss:$2 sm:$0xff]
        %s555 = scalar_lea.vmem [#allocation2], 16
        %v556 = vld [vmem:[%s555] ss:$2 sm:$0xff]
        %s557 = scalar_lea.vmem [#allocation2], 32
        %v558 = vld [vmem:[%s557] ss:$2 sm:$0xff]
        %s559 = scalar_lea.vmem [#allocation2], 48
        %v560 = vld [vmem:[%s559] ss:$2 sm:$0xff]
        %s561 = scalar_lea.vmem [#allocation2], 1
        %v562 = vld [vmem:[%s561] ss:$2 sm:$0xff]
        %s563 = scalar_lea.vmem [#allocation2], 17
        %v564 = vld [vmem:[%s563] ss:$2 sm:$0xff]
        %s565 = scalar_lea.vmem [#allocation2], 33
        %v566 = vld [vmem:[%s565] ss:$2 sm:$0xff]
        %s567 = scalar_lea.vmem [#allocation2], 49
        %v568 = vld [vmem:[%s567] ss:$2 sm:$0xff]
        %v569 = vadd.f32 %v554, %v562
        %v570 = vadd.f32 %v556, %v564
        %v571 = vadd.f32 %v558, %v566
        %v572 = vadd.f32 %v560, %v568
        %s573 = smul.u32 0, 8
        %s574 = scalar_lea.vmem %s217, %s573 [#allocation3]
        %575 = vst.msk [vmem:[%s574] sm:$0xff] %vm545, %v569
        %576 = vst.msk [vmem:[%s574 + $0x8] sm:$0xff] %vm545, %v570
        %577 = vst.msk [vmem:[%s574 + $0x10] sm:$0xff] %vm545, %v571
        %578 = vst.msk [vmem:[%s574 + $0x18] sm:$0xff] %vm545, %v572
        %s579 = sand.u32 %s131, 1
        %s580 = scalar_lea.sflag [#allocation4], %s579
        %s581 = sand.u32 %s131, 1
        %s582 = smul.addr %s581, 32
        %s583 = scalar_lea.vmem [#allocation3], %s582
        // Predicated region
        $region37: #{tpu_custom_call.1} parent=35 // pred_check
          %p584 = pneg %p141
        $region38: #{tpu_custom_call.1} parent=35 // pred_check_branch
          %586 = sbr.rel (%p584) target = $region40
        $region39: #{tpu_custom_call.1} parent=35 // pred_region
          %s587 = smul.u32 4, %s23
          %s589 = ssub.s32 512, 512
          %590 = vsyncadd %s580, %s589
          %s591 = smul.addr %s22, 8
          %s592 = sadd.s32 %s587, %s591
          %s593 = smul.addr %s592, 128
          %s594 = scalar_lea.hbm %s4, %s593
          %s595 = sshll.u32 %s583, 4
          %s596 = int_to_ptr.vmem [resolvable:$true] %s595
          %601 = dma.vmem_to_hbm [thread:$0]  %s596, 512, %s594, %s580, 128, 128, 8
        $region40: #{tpu_custom_call.1} parent=35 // pred_fallthru
          _
      $region36: #{tpu_custom_call.1} parent=5 // pred_fallthru
        _
      %p602 = scmp.le.s32.totalorder 2, %s13
      // Predicated region
      $region41: #{tpu_custom_call.1} parent=5 // pred_check
        %p603 = pneg %p602
      $region42: #{tpu_custom_call.1} parent=5 // pred_check_branch
        %605 = sbr.rel (%p603) target = $region44
      $region43: #{tpu_custom_call.1} parent=5 // pred_region
        %s606 = ssub.s32 %s13, 2
        // Predicated region
        $region45: #{tpu_custom_call.1} parent=43 // pred_check
          %p607 = pneg %p147
        $region46: #{tpu_custom_call.1} parent=43 // pred_check_branch
          %609 = sbr.rel (%p607) target = $region48
        $region47: #{tpu_custom_call.1} parent=43 // pred_region
          %s610 = sand.u32 %s132, 1
          %s611 = scalar_lea.sflag [#allocation4], %s610
          %s612 = sand.u32 %s132, 1
          %s613 = smul.addr %s612, 32
          %s614 = scalar_lea.vmem [#allocation3], %s613
          %615 = dma.done %s611, 512
        $region48: #{tpu_custom_call.1} parent=43 // pred_fallthru
          _
      $region44: #{tpu_custom_call.1} parent=5 // pred_fallthru
        _
    $region6: #{tpu_custom_call.1} parent=1 // loop_footer
      %s17 = sadd.s32 1, %s13
    $region7: #{tpu_custom_call.1} parent=1 // loop_footer_branch
      %12 = sbr.rel target = $region3
    $region8: #{tpu_custom_call.1} parent=1 // loop_exit
      _
    %616 = vsyncpa [#allocation4], 1
    %s617 = scalar_lea.sflag [#allocation4], 1
    %618 = vsyncpa %s617, 1

</llo_original>
